<compile_context>
chip_gen: v6e
topology: v6e:2x2x1
jax: 0.10.0
libtpu: 0.0.40
codegen_flags: <defaults>
</compile_context>

<pallas_src>
import jax
import jax.numpy as jnp
from jax import lax
from jax.experimental import pallas as pl
from jax.experimental.pallas import tpu as pltpu

EPS = 1e-5  # nn.BatchNorm2d default eps


def _round_up(x, m):
    return (x + m - 1) // m * m


# ----------------------------- Pallas kernels -----------------------------

def _matmul_kernel(a_ref, b_ref, o_ref):
    # Full-K block: one MXU pass per (i, j) output tile, f32 accumulation.
    o_ref[...] = jnp.dot(a_ref[...], b_ref[...],
                         preferred_element_type=jnp.float32)


def _bn_stats_norm(x, g, b):
    mean = jnp.mean(x, axis=0, keepdims=True)                 # per-channel batch mean
    var = jnp.mean(jnp.square(x - mean), axis=0, keepdims=True)  # biased variance
    return (x - mean) * lax.rsqrt(var + EPS) * g + b


def _bn_relu_kernel(x_ref, g_ref, b_ref, o_ref):
    o_ref[...] = jnp.maximum(_bn_stats_norm(x_ref[...], g_ref[...], b_ref[...]), 0.0)


def _bn_add_relu_kernel(x_ref, s_ref, g_ref, b_ref, o_ref):
    # relu( bn(conv2_out) + identity_shortcut )
    y = _bn_stats_norm(x_ref[...], g_ref[...], b_ref[...])
    o_ref[...] = jnp.maximum(y + s_ref[...], 0.0)


def _bn2_add_relu_kernel(x_ref, s_ref, g_ref, b_ref, gs_ref, bs_ref, o_ref):
    # relu( bn(conv2_out) + bn(shortcut_conv_out) )  -- projection shortcut
    y = _bn_stats_norm(x_ref[...], g_ref[...], b_ref[...])
    ys = _bn_stats_norm(s_ref[...], gs_ref[...], bs_ref[...])
    o_ref[...] = jnp.maximum(y + ys, 0.0)


def _max9_kernel(t0, t1, t2, t3, t4, t5, t6, t7, t8, o_ref):
    m = jnp.maximum(t0[...], t1[...])
    m = jnp.maximum(m, t2[...])
    m = jnp.maximum(m, t3[...])
    m = jnp.maximum(m, t4[...])
    m = jnp.maximum(m, t5[...])
    m = jnp.maximum(m, t6[...])
    m = jnp.maximum(m, t7[...])
    m = jnp.maximum(m, t8[...])
    o_ref[...] = m


def _head_kernel(x_ref, w_ref, b_ref, o_ref):
    # AdaptiveAvgPool2d((1,1)) + Flatten + Linear(512,2) + Sigmoid, fused.
    pooled = jnp.mean(x_ref[...], axis=1)                     # (N, C)
    y = jnp.dot(pooled, w_ref[...], preferred_element_type=jnp.float32) + b_ref[...]
    o_ref[...] = 1.0 / (1.0 + jnp.exp(-y))


# ----------------------------- wrappers -----------------------------------

def pallas_matmul(a, b):
    """a: (M, K) f32, b: (K, N) f32 -> (M, N) f32.

    bf16 MXU operands, full-K blocks (no K grid axis), M-adaptive tile height.
    """
    M, K = a.shape
    N = b.shape[1]

    tm = min(256, _round_up(M, 16))        # bf16 sublane granularity is 16
    tn = 256 if N >= 512 else 128          # keeps >=2 N blocks for wide layers
    Mp = _round_up(M, tm)
    Np = _round_up(N, tn)

    ap = jnp.pad(a, ((0, Mp - M), (0, 0))).astype(jnp.bfloat16)
    bp = jnp.pad(b, ((0, 0), (0, Np - N))).astype(jnp.bfloat16)

    out = pl.pallas_call(
        _matmul_kernel,
        out_shape=jax.ShapeDtypeStruct((Mp, Np), jnp.float32),
        grid_spec=pltpu.PrefetchScalarGridSpec(
            num_scalar_prefetch=0,
            grid=(Mp // tm, Np // tn),
            in_specs=[pl.BlockSpec((tm, K), lambda i, j: (i, 0)),
                      pl.BlockSpec((K, tn), lambda i, j: (0, j))],
            out_specs=pl.BlockSpec((tm, tn), lambda i, j: (i, j)),
        ),
        compiler_params=pltpu.CompilerParams(
            dimension_semantics=("parallel", "parallel")),
    )(ap, bp)
    return out[:M, :N]


def conv2d(x_nhwc, w_oihw, stride, padding):
    """Matches nn.Conv2d(..., bias=False). w is PyTorch layout (Cout,Cin,KH,KW)."""
    N, H, W, Cin = x_nhwc.shape
    Cout, _, KH, KW = w_oihw.shape
    Ho = (H + 2 * padding - KH) // stride + 1
    Wo = (W + 2 * padding - KW) // stride + 1
    xp = jnp.pad(x_nhwc, ((0, 0), (padding, padding), (padding, padding), (0, 0)))
    # im2col glue (K axis ordered (ky, kx, cin)); activations here are small.
    # TODO(synk): fold the KH*KW taps into the matmul K loop (shifted-window
    # index_map) to avoid materializing the patch tensor for larger inputs.
    patches = []
    for ky in range(KH):
        for kx in range(KW):
            patches.append(xp[:, ky:ky + stride * Ho:stride,
                               kx:kx + stride * Wo:stride, :])
    a = jnp.concatenate(patches, axis=-1).reshape(N * Ho * Wo, KH * KW * Cin)
    wm = jnp.transpose(w_oihw, (2, 3, 1, 0)).reshape(KH * KW * Cin, Cout)
    out = pallas_matmul(a, wm)
    return out.reshape(N, Ho, Wo, Cout)


def batchnorm_relu(x_nhwc, gamma, beta):
    N, H, W, C = x_nhwc.shape
    x2 = x_nhwc.reshape(N * H * W, C)
    y = pl.pallas_call(
        _bn_relu_kernel, out_shape=jax.ShapeDtypeStruct(x2.shape, jnp.float32)
    )(x2, gamma.reshape(1, C), beta.reshape(1, C))
    return y.reshape(N, H, W, C)


def bn_add_relu(x_nhwc, sc_nhwc, gamma, beta, sc_gamma=None, sc_beta=None):
    """Fused: bn(x) [+ bn(sc) if projection shortcut] + residual add + ReLU."""
    N, H, W, C = x_nhwc.shape
    x2 = x_nhwc.reshape(N * H * W, C)
    s2 = sc_nhwc.reshape(N * H * W, C)
    if sc_gamma is None:
        y = pl.pallas_call(
            _bn_add_relu_kernel,
            out_shape=jax.ShapeDtypeStruct(x2.shape, jnp.float32),
        )(x2, s2, gamma.reshape(1, C), beta.reshape(1, C))
    else:
        y = pl.pallas_call(
            _bn2_add_relu_kernel,
            out_shape=jax.ShapeDtypeStruct(x2.shape, jnp.float32),
        )(x2, s2, gamma.reshape(1, C), beta.reshape(1, C),
          sc_gamma.reshape(1, C), sc_beta.reshape(1, C))
    return y.reshape(N, H, W, C)


def maxpool3x3_s2_p1(x_nhwc):
    N, H, W, C = x_nhwc.shape
    k, s, p = 3, 2, 1
    Ho = (H + 2 * p - k) // s + 1
    Wo = (W + 2 * p - k) // s + 1
    neg = jnp.finfo(jnp.float32).min
    xp = jnp.pad(x_nhwc, ((0, 0), (p, p), (p, p), (0, 0)), constant_values=neg)
    M = N * Ho * Wo
    # Lane-dense 2D shape for the elementwise max (C=64 would only half-fill
    # the 128-lane vregs otherwise).  Pure elementwise -> reshape is free.
    if (M * C) % 128 == 0:
        eshape = (M * C // 128, 128)
    else:
        eshape = (M, C)
    taps = [xp[:, ky:ky + s * Ho:s, kx:kx + s * Wo:s, :].reshape(eshape)
            for ky in range(k) for kx in range(k)]
    y = pl.pallas_call(
        _max9_kernel, out_shape=jax.ShapeDtypeStruct(eshape, jnp.float32)
    )(*taps)
    return y.reshape(N, Ho, Wo, C)


def res_block(x, p):
    stride = p["stride"]
    out = conv2d(x, p["conv1_w"], stride=stride, padding=1)
    out = batchnorm_relu(out, p["bn1_g"], p["bn1_b"])
    out = conv2d(out, p["conv2_w"], stride=1, padding=1)
    if "sc_w" in p:
        sc = conv2d(x, p["sc_w"], stride=stride, padding=0)
        return bn_add_relu(out, sc, p["bn2_g"], p["bn2_b"], p["sc_g"], p["sc_b"])
    return bn_add_relu(out, x, p["bn2_g"], p["bn2_b"])


def resnet_forward(params, x_nchw):
    x = jnp.transpose(x_nchw, (0, 2, 3, 1))             # NCHW -> NHWC
    out = conv2d(x, params["conv1_w"], stride=2, padding=3)
    out = batchnorm_relu(out, params["bn1_g"], params["bn1_b"])
    out = maxpool3x3_s2_p1(out)
    for blk in params["blocks"]:
        out = res_block(out, blk)
    N, H, W, C = out.shape
    logits = pl.pallas_call(
        _head_kernel, out_shape=jax.ShapeDtypeStruct((N, 2), jnp.float32)
    )(out.reshape(N, H * W, C), params["fc_w"], params["fc_b"])
    return logits


# ----------------------------- parameters ---------------------------------

def init_params(key):
    keys = iter(jax.random.split(key, 64))

    def conv_w(cout, cin, k):
        fan_in = cin * k * k
        return jax.random.normal(next(keys), (cout, cin, k, k),
                                 jnp.float32) * (2.0 / fan_in) ** 0.5

    params = {
        "conv1_w": conv_w(64, 3, 7),
        "bn1_g": jnp.ones((64,), jnp.float32),
        "bn1_b": jnp.zeros((64,), jnp.float32),
    }
    blocks = []
    for cin, cout, stride in [(64, 64, 1), (64, 128, 2),
                              (128, 256, 2), (256, 512, 2)]:
        for ic, st in [(cin, stride), (cout, 1)]:
            blk = {
                "stride": st,
                "conv1_w": conv_w(cout, ic, 3),
                "bn1_g": jnp.ones((cout,), jnp.float32),
                "bn1_b": jnp.zeros((cout,), jnp.float32),
                "conv2_w": conv_w(cout, cout, 3),
                "bn2_g": jnp.ones((cout,), jnp.float32),
                "bn2_b": jnp.zeros((cout,), jnp.float32),
            }
            if st != 1 or ic != cout:
                blk["sc_w"] = conv_w(cout, ic, 1)
                blk["sc_g"] = jnp.ones((cout,), jnp.float32)
                blk["sc_b"] = jnp.zeros((cout,), jnp.float32)
            blocks.append(blk)
    params["blocks"] = blocks
    bound = 1.0 / (512.0 ** 0.5)
    params["fc_w"] = jax.random.uniform(next(keys), (512, 2), jnp.float32,
                                        -bound, bound)
    params["fc_b"] = jax.random.uniform(next(keys), (1, 2), jnp.float32,
                                        -bound, bound)
    return params


if __name__ == "__main__":
    key = jax.random.PRNGKey(0)
    pkey, xkey = jax.random.split(key)
    params = init_params(pkey)
    x = jax.random.normal(xkey, (2, 3, 32, 32), jnp.float32)  # NCHW like PyTorch
    out = resnet_forward(params, x)
    out = jax.block_until_ready(out)
    assert out.shape == (2, 2)
    assert bool(jnp.all((out >= 0.0) & (out <= 1.0)))
    print("KERNEL_OK")
</pallas_src>

<mosaic_0001>
module attributes {stable_mosaic.version = 11 : i64} {
  func.func @_matmul_kernel(%arg0: i32, %arg1: i32, %arg2: memref<256x147xbf16, #tpu.memory_space<vmem>>, %arg3: memref<147x128xbf16, #tpu.memory_space<vmem>>, %arg4: memref<256x128xf32, #tpu.memory_space<vmem>>) attributes {dimension_semantics = [#tpu.dimension_semantics<parallel>, #tpu.dimension_semantics<parallel>], iteration_bounds = array<i64: 2, 1>, scalar_prefetch = 0 : i64, scratch_operands = 0 : i64, tpu.core_type = #tpu.core_type<tc>, window_params = [{transform_indices = @transform_0, window_bounds = array<i64: 256, 147>}, {transform_indices = @transform_1, window_bounds = array<i64: 147, 128>}, {transform_indices = @transform_2, window_bounds = array<i64: 256, 128>}]} {
    %c0 = arith.constant 0 : index
    %c0_0 = arith.constant 0 : index
    %0 = vector.load %arg2[%c0, %c0_0] : memref<256x147xbf16, #tpu.memory_space<vmem>>, vector<256x147xbf16>
    %c0_1 = arith.constant 0 : index
    %c0_2 = arith.constant 0 : index
    %1 = vector.load %arg3[%c0_1, %c0_2] : memref<147x128xbf16, #tpu.memory_space<vmem>>, vector<147x128xbf16>
    %cst = arith.constant dense<0.000000e+00> : vector<256x128xf32>
    %2 = tpu.matmul %0, %1, %cst {dimension_numbers = #tpu.dot_dimension_numbers<[1], [0], [0], [1], [0, 0, 1, 1], [], []>} : vector<256x147xbf16>, vector<147x128xbf16>, vector<256x128xf32> -> vector<256x128xf32>
    %c0_3 = arith.constant 0 : index
    %c0_4 = arith.constant 0 : index
    %3 = vector.load %arg4[%c0_3, %c0_4] : memref<256x128xf32, #tpu.memory_space<vmem>>, vector<256x128xf32>
    tpu.vector_store %arg4[%c0_3, %c0_4], %2 {strides = array<i32>} : memref<256x128xf32, #tpu.memory_space<vmem>>, vector<256x128xf32>,
    return
  }
  func.func @transform_0(%arg0: i32, %arg1: i32) -> (i32, i32) {
    %c0_i32 = arith.constant 0 : i32
    %c0_i32_0 = arith.constant 0 : i32
    return %arg0, %c0_i32 : i32, i32
  }
  func.func @transform_1(%arg0: i32, %arg1: i32) -> (i32, i32) {
    %c0_i32 = arith.constant 0 : i32
    %c0_i32_0 = arith.constant 0 : i32
    return %c0_i32, %arg1 : i32, i32
  }
  func.func @transform_2(%arg0: i32, %arg1: i32) -> (i32, i32) {
    %c0_i32 = arith.constant 0 : i32
    return %arg0, %arg1 : i32, i32
  }
}

</mosaic_0001>

<llo_original>
// kernel: tpu_custom_call.1
$region0: #{tpu_custom_call.1}
  #allocation0 [shape = 'u32[]', space=smem, size = 0x4, offset = 0x4, fixed_abs, tag = 'smem constant byte address 0x4 - core index']
  #allocation1 [shape = 'u32[144,128]{1,0:T(1,128)}', space=vmem, size = 0x12000, scoped, tag = 'internal scratch']
  %s0 = inlined_call_operand.vmem [shape: bf16[512,147], index: 0, kind: input, shape index: {}]
  %s1 = inlined_call_operand.vmem [shape: bf16[147,128], index: 1, kind: input, shape index: {}]
  %s2 = inlined_call_operand.hbm [shape: f32[512,128], index: 2, kind: output, shape index: {}]
  %s3 = sld [smem:[#allocation0]]
  $region41: #{tpu_custom_call.1} parent=0
    _
  %s5 = ssub.s32 1, %s3
  %s6 = scalar_select 0, %s5, %s3
  $region1: #{tpu_custom_call.1} parent=0
    #allocation2 [shape = 'u8[262144]{0}', space=vmem, size = 0x40000, scoped, tag = 'output window, operand 0']
    #allocation3 [shape = 's32[2]{0}', space=sflag, size = 0x8, scoped, tag = 'scoped memory for tpu_custom_call.1']
    %7 = vsyncpa [#allocation3], 0
    %s8 = scalar_lea.sflag [#allocation3], 1
    %9 = vsyncpa %s8, 0
    loop: start=0, step=1, limit=4
    $region2: #{tpu_custom_call.1} parent=1 // loop_pre_header
      _
    $region3: #{tpu_custom_call.1} parent=1 // loop_header
      %s11 = sphi 0, %s15
      %p12 = scmp.ge.s32.totalorder %s11, 4
      %s18 = sphi 0, %s30
      %s19 = sphi 0, %s26
      %s20 = sphi 0, %s18
      %s21 = sphi 0, %s19
      %s22 = sphi 0, %s20
      %s23 = sphi 0, %s21
      %s33 = sphi 0, %s35
      %s36 = sphi 0, %s33
      %s37 = sphi 0, %s36
      %s53 = sphi 0, %s37
      %s59 = sphi 0, %s61
      %s62 = sphi 0, %s59
      %s63 = sphi 0, %s62
      %s79 = sphi 0, %s63
      %s87 = sphi 0, %s89
      %s90 = sphi 0, %s87
      %s91 = sphi 0, %s90
      %s107 = sphi 0, %s91
    $region4: #{tpu_custom_call.1} parent=1 // loop_header_branch
      %14 = sbr.rel (%p12) target = $region8
    $region5: #{tpu_custom_call.1} parent=1 // loop_body
      %s16 = ssub.s32 %s11, 1
      %s17 = ssub.s32 %s11, 2
      %s24 = sadd.s32 1, %s19
      %p25 = scmp.ge.s32.totalorder %s24, 1
      %s26 = scalar_select %p25, 0, %s24
      %s27 = sadd.s32 1, %s18
      %s28 = scalar_select %p25, %s27, %s18
      %p29 = scmp.ge.s32.totalorder %s28, 2
      %s30 = scalar_select %p29, 0, %s28
      %s31 = ssub.s32 %s18, %s30
      %p32 = scmp.eq.s32.totalorder %s31, 0
      %s34 = sadd.s32 %s33, 1
      %s35 = scalar_select %p32, %s33, %s34
      %p38 = pneg %p32
      %p39 = scmp.eq.s32.totalorder %s11, 1
      %p40 = por %p38, %p39
      %p41 = scmp.ne.s32.totalorder %s33, %s36
      %p42 = scmp.eq.s32.totalorder %s11, 0
      %p43 = por %p41, %p42
      %p44 = scmp.ne.s32.totalorder %s33, %s36
      %p45 = scmp.eq.s32.totalorder %s16, 1
      %p46 = por %p44, %p45
      %p47 = scmp.ne.s32.totalorder %s36, %s37
      %p48 = scmp.eq.s32.totalorder %s16, 0
      %p49 = por %p47, %p48
      %p50 = scmp.ne.s32.totalorder %s36, %s37
      %p51 = scmp.eq.s32.totalorder %s17, 1
      %p52 = por %p50, %p51
      %p54 = scmp.ne.s32.totalorder %s37, %s53
      %p55 = scmp.eq.s32.totalorder %s17, 0
      %p56 = por %p54, %p55
      %s57 = ssub.s32 %s19, %s26
      %p58 = scmp.eq.s32.totalorder %s57, 0
      %s60 = sadd.s32 %s59, 1
      %s61 = scalar_select %p58, %s59, %s60
      %p64 = pneg %p58
      %p65 = scmp.eq.s32.totalorder %s11, 1
      %p66 = por %p64, %p65
      %p67 = scmp.ne.s32.totalorder %s59, %s62
      %p68 = scmp.eq.s32.totalorder %s11, 0
      %p69 = por %p67, %p68
      %p70 = scmp.ne.s32.totalorder %s59, %s62
      %p71 = scmp.eq.s32.totalorder %s16, 1
      %p72 = por %p70, %p71
      %p73 = scmp.ne.s32.totalorder %s62, %s63
      %p74 = scmp.eq.s32.totalorder %s16, 0
      %p75 = por %p73, %p74
      %p76 = scmp.ne.s32.totalorder %s62, %s63
      %p77 = scmp.eq.s32.totalorder %s17, 1
      %p78 = por %p76, %p77
      %p80 = scmp.ne.s32.totalorder %s63, %s79
      %p81 = scmp.eq.s32.totalorder %s17, 0
      %p82 = por %p80, %p81
      %s83 = ssub.s32 %s18, %s30
      %s84 = ssub.s32 %s19, %s26
      %s85 = sor.u32 %s83, %s84
      %p86 = scmp.eq.s32.totalorder %s85, 0
      %s88 = sadd.s32 %s87, 1
      %s89 = scalar_select %p86, %s87, %s88
      %p92 = pneg %p86
      %p93 = scmp.eq.s32.totalorder %s11, 1
      %p94 = por %p92, %p93
      %p95 = scmp.ne.s32.totalorder %s87, %s90
      %p96 = scmp.eq.s32.totalorder %s11, 0
      %p97 = por %p95, %p96
      %p98 = scmp.ne.s32.totalorder %s87, %s90
      %p99 = scmp.eq.s32.totalorder %s16, 1
      %p100 = por %p98, %p99
      %p101 = scmp.ne.s32.totalorder %s90, %s91
      %p102 = scmp.eq.s32.totalorder %s16, 0
      %p103 = por %p101, %p102
      %p104 = scmp.ne.s32.totalorder %s90, %s91
      %p105 = scmp.eq.s32.totalorder %s17, 1
      %p106 = por %p104, %p105
      %p108 = scmp.ne.s32.totalorder %s91, %s107
      %p109 = scmp.eq.s32.totalorder %s17, 0
      %p110 = por %p108, %p109
      %p111 = scmp.le.s32.totalorder 1, %s11
      %p112 = scmp.lt.s32.totalorder %s11, 3
      %p113 = pnand %p111, %p112
      %p114 = pneg %p113
      // Predicated region
      $region9: #{tpu_custom_call.1} parent=5 // pred_check
        _
      $region10: #{tpu_custom_call.1} parent=5 // pred_check_branch
        %116 = sbr.rel (%p113) target = $region12
      $region11: #{tpu_custom_call.1} parent=5 // pred_region
        %s117 = ssub.s32 %s11, 1
        // Predicated region
        $region13: #{tpu_custom_call.1} parent=11 // pred_check
          %p118 = pneg %p75
        $region14: #{tpu_custom_call.1} parent=11 // pred_check_branch
          %120 = sbr.rel (%p118) target = $region16
        $region15: #{tpu_custom_call.1} parent=11 // pred_region
          %p121 = scmp.lt.s32.totalorder %s21, 0
          %s122 = scalar_select %p121, %s21, 0
          %s123 = smul.addr %s122, 4
          %s124 = scalar_lea.vmem %s1, %s123
        $region16: #{tpu_custom_call.1} parent=11 // pred_fallthru
          _
      $region12: #{tpu_custom_call.1} parent=5 // pred_fallthru
        _
      %p125 = scmp.lt.s32.totalorder %s11, 2
      // Predicated region
      $region17: #{tpu_custom_call.1} parent=5 // pred_check
        %p126 = pneg %p125
      $region18: #{tpu_custom_call.1} parent=5 // pred_check_branch
        %128 = sbr.rel (%p126) target = $region20
      $region19: #{tpu_custom_call.1} parent=5 // pred_region
        // Predicated region
        $region21: #{tpu_custom_call.1} parent=19 // pred_check
          %p129 = pneg %p43
        $region22: #{tpu_custom_call.1} parent=19 // pred_check_branch
          %131 = sbr.rel (%p129) target = $region24
        $region23: #{tpu_custom_call.1} parent=19 // pred_region
          %s132 = smul.u32 32, %s18
          %p133 = scmp.lt.s32.totalorder %s132, 63
          %s134 = scalar_select %p133, %s132, 63
          %s135 = smul.addr %s134, 2
          %s136 = smul.addr %s135, 4
          %s137 = scalar_lea.vmem %s0, %s136
          %s138 = smul.u32 32, %s18
        $region24: #{tpu_custom_call.1} parent=19 // pred_fallthru
          _
      $region20: #{tpu_custom_call.1} parent=5 // pred_fallthru
        _
      %p139 = scmp.le.s32.totalorder 1, %s11
      %p140 = scmp.lt.s32.totalorder %s11, 3
      %p141 = pnand %p139, %p140
      %p142 = pneg %p141
      // Predicated region
      $region25: #{tpu_custom_call.1} parent=5 // pred_check
        _
      $region26: #{tpu_custom_call.1} parent=5 // pred_check_branch
        %144 = sbr.rel (%p141) target = $region28
      $region27: #{tpu_custom_call.1} parent=5 // pred_region
        %s145 = ssub.s32 %s11, 1
        %s146 = smul.u32 32, %s20
        %p147 = scmp.lt.s32.totalorder %s146, 63
        %s148 = scalar_select %p147, %s146, 63
        %s149 = smul.addr %s148, 2
        %s150 = smul.addr %s149, 4
        %s151 = scalar_lea.vmem %s0, %s150
        %p152 = pneg %p49
        %p153 = pneg %p46
        %p154 = scmp.lt.s32.totalorder %s21, 0
        %s155 = scalar_select %p154, %s21, 0
        %s156 = smul.addr %s155, 4
        %s157 = scalar_lea.vmem %s1, %s156
        %p158 = pneg %p75
        %p159 = pneg %p72
        %p160 = pneg %p103
        %p161 = pneg %p100
        %s162 = sand.u32 %s90, 1
        %s163 = scalar_lea.sflag [#allocation3], %s162
        %s164 = sand.u32 %s90, 1
        %s165 = smul.addr %s164, 256
        %s166 = scalar_lea.vmem [#allocation2], %s165
        %s167 = smul.u32 32, %s20
        %p168 = scmp.lt.s32.totalorder %s167, 63
        %s169 = scalar_select %p168, %s167, 63
        %s170 = smul.addr %s169, 2
        %s171 = smul.addr %s170, 4
        %s172 = scalar_lea.vmem %s0, %s171
        %s173 = smul.u32 32, %s20
        %p174 = scmp.lt.s32.totalorder %s21, 0
        %s175 = scalar_select %p174, %s21, 0
        %s176 = smul.addr %s175, 4
        %s177 = scalar_lea.vmem %s1, %s176
        %s178 = smul.u32 32, %s20
        %v180 = vld [vmem:[%s172] sm:$0xff]
        %v181 = vld [vmem:[%s172 + $0x8] sm:$0xff]
        %v182 = vld [vmem:[%s172 + $0x10] sm:$0xff]
        %v183 = vld [vmem:[%s172 + $0x18] sm:$0xff]
        %v184 = vld [vmem:[%s172 + $0x20] sm:$0xff]
        %v185 = vld [vmem:[%s172 + $0x28] sm:$0xff]
        %v186 = vld [vmem:[%s172 + $0x30] sm:$0xff]
        %v187 = vld [vmem:[%s172 + $0x38] sm:$0xff]
        %v188 = vld [vmem:[%s172 + $0x40] sm:$0xff]
        %v189 = vld [vmem:[%s172 + $0x48] sm:$0xff]
        %v190 = vld [vmem:[%s172 + $0x50] sm:$0xff]
        %v191 = vld [vmem:[%s172 + $0x58] sm:$0xff]
        %v192 = vld [vmem:[%s172 + $0x60] sm:$0xff]
        %v193 = vld [vmem:[%s172 + $0x68] sm:$0xff]
        %v194 = vld [vmem:[%s172 + $0x70] sm:$0xff]
        %v195 = vld [vmem:[%s172 + $0x78] sm:$0xff]
        %v196 = vld [vmem:[%s172 + $0x80] sm:$0xff]
        %v197 = vld [vmem:[%s172 + $0x88] sm:$0xff]
        %v198 = vld [vmem:[%s172 + $0x90] sm:$0xff]
        %v199 = vld [vmem:[%s172 + $0x98] sm:$0xff]
        %v200 = vld [vmem:[%s172 + $0xa0] sm:$0xff]
        %v201 = vld [vmem:[%s172 + $0xa8] sm:$0xff]
        %v202 = vld [vmem:[%s172 + $0xb0] sm:$0xff]
        %v203 = vld [vmem:[%s172 + $0xb8] sm:$0xff]
        %v204 = vld [vmem:[%s172 + $0xc0] sm:$0xff]
        %v205 = vld [vmem:[%s172 + $0xc8] sm:$0xff]
        %v206 = vld [vmem:[%s172 + $0xd0] sm:$0xff]
        %v207 = vld [vmem:[%s172 + $0xd8] sm:$0xff]
        %v208 = vld [vmem:[%s172 + $0xe0] sm:$0xff]
        %v209 = vld [vmem:[%s172 + $0xe8] sm:$0xff]
        %v210 = vld [vmem:[%s172 + $0xf0] sm:$0xff]
        %v211 = vld [vmem:[%s172 + $0xf8] sm:$0xff]
        %v212 = vld [vmem:[%s177] sm:$0xf]
        %v213 = vld [vmem:[%s177 + $0x4] sm:$0xf]
        %v214 = vld [vmem:[%s177 + $0x8] sm:$0xf]
        %v215 = vld [vmem:[%s177 + $0xc] sm:$0xf]
        %v216 = vld [vmem:[%s177 + $0x10] sm:$0xf]
        %v217 = vld [vmem:[%s177 + $0x14] sm:$0xf]
        %v218 = vld [vmem:[%s177 + $0x18] sm:$0xf]
        %v219 = vld [vmem:[%s177 + $0x1c] sm:$0xf]
        %v220 = vld [vmem:[%s177 + $0x20] sm:$0xf]
        %v221 = vld [vmem:[%s177 + $0x24] sm:$0xf]
        %v222 = vld [vmem:[%s177 + $0x28] sm:$0xf]
        %v223 = vld [vmem:[%s177 + $0x2c] sm:$0xf]
        %v224 = vld [vmem:[%s177 + $0x30] sm:$0xf]
        %v225 = vld [vmem:[%s177 + $0x34] sm:$0xf]
        %v226 = vld [vmem:[%s177 + $0x38] sm:$0xf]
        %v227 = vld [vmem:[%s177 + $0x3c] sm:$0xf]
        %v228 = vld [vmem:[%s177 + $0x40] sm:$0xf]
        %v229 = vld [vmem:[%s177 + $0x44] sm:$0xf]
        %v230 = vld [vmem:[%s177 + $0x48] sm:$0x3]
        %v263 = vunpack.c.l.b16 %v180
        %v264 = vunpack.c.h.b16 %v180
        %v265 = vunpack.c.l.b16 %v181
        %v266 = vunpack.c.h.b16 %v181
        %v267 = vunpack.c.l.b16 %v182
        %v268 = vunpack.c.h.b16 %v182
        %v269 = vunpack.c.l.b16 %v183
        %v270 = vunpack.c.h.b16 %v183
        %v271 = vunpack.c.l.b16 %v184
        %v272 = vunpack.c.h.b16 %v184
        %v273 = vunpack.c.l.b16 %v185
        %v274 = vunpack.c.h.b16 %v185
        %v275 = vunpack.c.l.b16 %v186
        %v276 = vunpack.c.h.b16 %v186
        %v277 = vunpack.c.l.b16 %v187
        %v278 = vunpack.c.h.b16 %v187
        %v279 = vunpack.c.l.b16 %v188
        %v280 = vunpack.c.h.b16 %v188
        %v281 = vunpack.c.l.b16 %v189
        %v282 = vunpack.c.h.b16 %v189
        %v283 = vunpack.c.l.b16 %v190
        %v284 = vunpack.c.h.b16 %v190
        %v285 = vunpack.c.l.b16 %v191
        %v286 = vunpack.c.h.b16 %v191
        %v287 = vunpack.c.l.b16 %v192
        %v288 = vunpack.c.h.b16 %v192
        %v289 = vunpack.c.l.b16 %v193
        %v290 = vunpack.c.h.b16 %v193
        %v291 = vunpack.c.l.b16 %v194
        %v292 = vunpack.c.h.b16 %v194
        %v293 = vunpack.c.l.b16 %v195
        %v294 = vunpack.c.h.b16 %v195
        %v295 = vunpack.c.l.b16 %v196
        %v296 = vunpack.c.h.b16 %v196
        %v297 = vunpack.c.l.b16 %v197
        %v298 = vunpack.c.h.b16 %v197
        %v299 = vunpack.c.l.b16 %v198
        %v300 = vunpack.c.h.b16 %v198
        %v301 = vunpack.c.l.b16 %v199
        %v302 = vunpack.c.h.b16 %v199
        %v303 = vunpack.c.l.b16 %v200
        %v304 = vunpack.c.h.b16 %v200
        %v305 = vunpack.c.l.b16 %v201
        %v306 = vunpack.c.h.b16 %v201
        %v307 = vunpack.c.l.b16 %v202
        %v308 = vunpack.c.h.b16 %v202
        %v309 = vunpack.c.l.b16 %v203
        %v310 = vunpack.c.h.b16 %v203
        %v311 = vunpack.c.l.b16 %v204
        %v312 = vunpack.c.h.b16 %v204
        %v313 = vunpack.c.l.b16 %v205
        %v314 = vunpack.c.h.b16 %v205
        %v315 = vunpack.c.l.b16 %v206
        %v316 = vunpack.c.h.b16 %v206
        %v317 = vunpack.c.l.b16 %v207
        %v318 = vunpack.c.h.b16 %v207
        %v319 = vunpack.c.l.b16 %v208
        %v320 = vunpack.c.h.b16 %v208
        %v321 = vunpack.c.l.b16 %v209
        %v322 = vunpack.c.h.b16 %v209
        %v323 = vunpack.c.l.b16 %v210
        %v324 = vunpack.c.h.b16 %v210
        %v325 = vunpack.c.l.b16 %v211
        %v326 = vunpack.c.h.b16 %v211
        %v327 = vpack.c.b16 %v265, %v263
        %v328 = vpack.c.b16 %v266, %v264
        %v329 = vpack.c.b16 %v269, %v267
        %v330 = vpack.c.b16 %v270, %v268
        %v331 = vpack.c.b16 %v273, %v271
        %v332 = vpack.c.b16 %v274, %v272
        %v333 = vpack.c.b16 %v277, %v275
        %v334 = vpack.c.b16 %v278, %v276
        %v335 = vpack.c.b16 %v281, %v279
        %v336 = vpack.c.b16 %v282, %v280
        %v337 = vpack.c.b16 %v285, %v283
        %v338 = vpack.c.b16 %v286, %v284
        %v339 = vpack.c.b16 %v289, %v287
        %v340 = vpack.c.b16 %v290, %v288
        %v341 = vpack.c.b16 %v293, %v291
        %v342 = vpack.c.b16 %v294, %v292
        %v343 = vpack.c.b16 %v297, %v295
        %v344 = vpack.c.b16 %v298, %v296
        %v345 = vpack.c.b16 %v301, %v299
        %v346 = vpack.c.b16 %v302, %v300
        %v347 = vpack.c.b16 %v305, %v303
        %v348 = vpack.c.b16 %v306, %v304
        %v349 = vpack.c.b16 %v309, %v307
        %v350 = vpack.c.b16 %v310, %v308
        %v351 = vpack.c.b16 %v313, %v311
        %v352 = vpack.c.b16 %v314, %v312
        %v353 = vpack.c.b16 %v317, %v315
        %v354 = vpack.c.b16 %v318, %v316
        %v355 = vpack.c.b16 %v321, %v319
        %v356 = vpack.c.b16 %v322, %v320
        %v357 = vpack.c.b16 %v325, %v323
        %v358 = vpack.c.b16 %v326, %v324
        %v394 = vunpack.c.l.b16 %v212
        %v395 = vunpack.c.l.b16 %v213
        %v396 = vunpack.c.l.b16 %v214
        %v397 = vunpack.c.l.b16 %v215
        %v398 = vunpack.c.l.b16 %v216
        %v399 = vunpack.c.l.b16 %v217
        %v400 = vunpack.c.l.b16 %v218
        %v401 = vunpack.c.l.b16 %v219
        %v402 = vunpack.c.l.b16 %v220
        %v403 = vunpack.c.l.b16 %v221
        %v404 = vunpack.c.l.b16 %v222
        %v405 = vunpack.c.l.b16 %v223
        %v406 = vunpack.c.l.b16 %v224
        %v407 = vunpack.c.l.b16 %v225
        %v408 = vunpack.c.l.b16 %v226
        %v409 = vunpack.c.l.b16 %v227
        %v410 = vunpack.c.l.b16 %v228
        %v411 = vunpack.c.l.b16 %v229
        %v412 = vunpack.c.l.b16 %v230
        %v413 = vpack.c.b16 %v395, %v394
        %v414 = vpack.c.b16 %v397, %v396
        %v415 = vpack.c.b16 %v399, %v398
        %v416 = vpack.c.b16 %v401, %v400
        %v417 = vpack.c.b16 %v403, %v402
        %v418 = vpack.c.b16 %v405, %v404
        %v419 = vpack.c.b16 %v407, %v406
        %v420 = vpack.c.b16 %v409, %v408
        %v421 = vpack.c.b16 %v411, %v410
        %v422 = vpack.c.b16 %v412, %v412
        %vm432 = vcmask 154624
        %v434 = vsel %vm432, %v328, 0
        %v437 = vsel %vm432, %v330, 0
        %v440 = vsel %vm432, %v332, 0
        %v443 = vsel %vm432, %v334, 0
        %v446 = vsel %vm432, %v336, 0
        %v449 = vsel %vm432, %v338, 0
        %v452 = vsel %vm432, %v340, 0
        %v455 = vsel %vm432, %v342, 0
        %v458 = vsel %vm432, %v344, 0
        %v461 = vsel %vm432, %v346, 0
        %v464 = vsel %vm432, %v348, 0
        %v467 = vsel %vm432, %v350, 0
        %v470 = vsel %vm432, %v352, 0
        %v473 = vsel %vm432, %v354, 0
        %v476 = vsel %vm432, %v356, 0
        %v479 = vsel %vm432, %v358, 0
        %vm481 = vcmask 1040384
        %vm482 = vcmask 1041408
        %v483 = vsel %vm481, 4294967295, 65535
        %v484 = vsel %vm482, %v483, 0
        %v486 = vand.u32 %v422, %v484
        %488 = vmatprep.subr.bf16.mxu0 0
        %489 = vmatpush1.bf16.msra.mxu0 %v420
        %490 = vmatprep.subr.bf16.mxu0 0
        %491 = vmatpush1.bf16.msra.mxu0 %v419
        %492 = vmatprep.subr.bf16.mxu0 0
        %493 = vmatpush1.bf16.msra.mxu0 %v418
        %494 = vmatprep.subr.bf16.mxu0 0
        %495 = vmatpush1.bf16.msra.mxu0 %v417
        %496 = vmatprep.subr.bf16.mxu0 0
        %497 = vmatpush1.bf16.msra.mxu0 %v416
        %498 = vmatprep.subr.bf16.mxu0 0
        %499 = vmatpush1.bf16.msra.mxu0 %v415
        %500 = vmatprep.subr.bf16.mxu0 0
        %501 = vmatpush1.bf16.msra.mxu0 %v414
        %502 = vmatprep.subr.bf16.mxu0 0
        %503 = vmatpush1.bf16.msra.mxu0 %v413
        %504 = vmatprep.subr.bf16.mxu0 0
        %505 = vmatpush2.bf16.msra.mxu0 0
        %506 = vmatprep.subr.bf16.mxu0 0
        %507 = vmatpush2.bf16.msra.mxu0 0
        %508 = vmatprep.subr.bf16.mxu0 0
        %509 = vmatpush2.bf16.msra.mxu0 0
        %510 = vmatprep.subr.bf16.mxu0 0
        %511 = vmatpush2.bf16.msra.mxu0 0
        %512 = vmatprep.subr.bf16.mxu0 0
        %513 = vmatpush2.bf16.msra.mxu0 0
        %514 = vmatprep.subr.bf16.mxu0 0
        %515 = vmatpush2.bf16.msra.mxu0 0
        %516 = vmatprep.subr.bf16.mxu0 0
        %517 = vmatpush2.bf16.msra.mxu0 %v486
        %518 = vmatprep.subr.bf16.mxu0 0
        %519 = vmatpush2.bf16.msra.mxu0 %v421
        %520 = vmatprep.mubr.bf16.mxu0 %v434
        %521 = vmatmul.mubr.bf16.gmra.mxu0 %v327
        %v522 = vpop.f32.mrf.mxu0
        %v523 = vadd.f32 0.0, %v522
        %v524 = vpop.f32.mrf.mxu0
        %v525 = vpop.f32.mrf.mxu0
        %v526 = vadd.f32 0.0, %v525
        %v527 = vpop.f32.mrf.mxu0
        %528 = vmatprep.mubr.bf16.mxu0 %v437
        %529 = vmatmul.mubr.bf16.gmra.mxu0 %v329
        %v530 = vpop.f32.mrf.mxu0
        %v531 = vadd.f32 0.0, %v530
        %v532 = vpop.f32.mrf.mxu0
        %v533 = vpop.f32.mrf.mxu0
        %v534 = vadd.f32 0.0, %v533
        %v535 = vpop.f32.mrf.mxu0
        %536 = vmatprep.mubr.bf16.mxu0 %v440
        %537 = vmatmul.mubr.bf16.gmra.mxu0 %v331
        %v538 = vpop.f32.mrf.mxu0
        %v539 = vadd.f32 0.0, %v538
        %v540 = vpop.f32.mrf.mxu0
        %v541 = vpop.f32.mrf.mxu0
        %v542 = vadd.f32 0.0, %v541
        %v543 = vpop.f32.mrf.mxu0
        %544 = vmatprep.mubr.bf16.mxu0 %v443
        %545 = vmatmul.mubr.bf16.gmra.mxu0 %v333
        %v546 = vpop.f32.mrf.mxu0
        %v547 = vadd.f32 0.0, %v546
        %v548 = vpop.f32.mrf.mxu0
        %v549 = vpop.f32.mrf.mxu0
        %v550 = vadd.f32 0.0, %v549
        %v551 = vpop.f32.mrf.mxu0
        %552 = vmatprep.mubr.bf16.mxu0 %v446
        %553 = vmatmul.mubr.bf16.gmra.mxu0 %v335
        %v554 = vpop.f32.mrf.mxu0
        %v555 = vadd.f32 0.0, %v554
        %v556 = vpop.f32.mrf.mxu0
        %v557 = vpop.f32.mrf.mxu0
        %v558 = vadd.f32 0.0, %v557
        %v559 = vpop.f32.mrf.mxu0
        %560 = vmatprep.mubr.bf16.mxu0 %v449
        %561 = vmatmul.mubr.bf16.gmra.mxu0 %v337
        %v562 = vpop.f32.mrf.mxu0
        %v563 = vadd.f32 0.0, %v562
        %v564 = vpop.f32.mrf.mxu0
        %v565 = vpop.f32.mrf.mxu0
        %v566 = vadd.f32 0.0, %v565
        %v567 = vpop.f32.mrf.mxu0
        %568 = vmatprep.mubr.bf16.mxu0 %v452
        %569 = vmatmul.mubr.bf16.gmra.mxu0 %v339
        %v570 = vpop.f32.mrf.mxu0
        %v571 = vadd.f32 0.0, %v570
        %v572 = vpop.f32.mrf.mxu0
        %v573 = vpop.f32.mrf.mxu0
        %v574 = vadd.f32 0.0, %v573
        %v575 = vpop.f32.mrf.mxu0
        %576 = vmatprep.mubr.bf16.mxu0 %v455
        %577 = vmatmul.mubr.bf16.gmra.mxu0 %v341
        %v578 = vpop.f32.mrf.mxu0
        %v579 = vadd.f32 0.0, %v578
        %v580 = vpop.f32.mrf.mxu0
        %v581 = vpop.f32.mrf.mxu0
        %v582 = vadd.f32 0.0, %v581
        %v583 = vpop.f32.mrf.mxu0
        %584 = vmatprep.mubr.bf16.mxu0 %v458
        %585 = vmatmul.mubr.bf16.gmra.mxu0 %v343
        %v586 = vpop.f32.mrf.mxu0
        %v587 = vadd.f32 0.0, %v586
        %v588 = vpop.f32.mrf.mxu0
        %v589 = vpop.f32.mrf.mxu0
        %v590 = vadd.f32 0.0, %v589
        %v591 = vpop.f32.mrf.mxu0
        %592 = vmatprep.mubr.bf16.mxu0 %v461
        %593 = vmatmul.mubr.bf16.gmra.mxu0 %v345
        %v594 = vpop.f32.mrf.mxu0
        %v595 = vadd.f32 0.0, %v594
        %v596 = vpop.f32.mrf.mxu0
        %v597 = vpop.f32.mrf.mxu0
        %v598 = vadd.f32 0.0, %v597
        %v599 = vpop.f32.mrf.mxu0
        %600 = vmatprep.mubr.bf16.mxu0 %v464
        %601 = vmatmul.mubr.bf16.gmra.mxu0 %v347
        %v602 = vpop.f32.mrf.mxu0
        %v603 = vadd.f32 0.0, %v602
        %v604 = vpop.f32.mrf.mxu0
        %v605 = vpop.f32.mrf.mxu0
        %v606 = vadd.f32 0.0, %v605
        %v607 = vpop.f32.mrf.mxu0
        %608 = vmatprep.mubr.bf16.mxu0 %v467
        %609 = vmatmul.mubr.bf16.gmra.mxu0 %v349
        %v610 = vpop.f32.mrf.mxu0
        %v611 = vadd.f32 0.0, %v610
        %v612 = vpop.f32.mrf.mxu0
        %v613 = vpop.f32.mrf.mxu0
        %v614 = vadd.f32 0.0, %v613
        %v615 = vpop.f32.mrf.mxu0
        %616 = vmatprep.mubr.bf16.mxu0 %v470
        %617 = vmatmul.mubr.bf16.gmra.mxu0 %v351
        %v618 = vpop.f32.mrf.mxu0
        %v619 = vadd.f32 0.0, %v618
        %v620 = vpop.f32.mrf.mxu0
        %v621 = vpop.f32.mrf.mxu0
        %v622 = vadd.f32 0.0, %v621
        %v623 = vpop.f32.mrf.mxu0
        %624 = vmatprep.mubr.bf16.mxu0 %v473
        %625 = vmatmul.mubr.bf16.gmra.mxu0 %v353
        %v626 = vpop.f32.mrf.mxu0
        %v627 = vadd.f32 0.0, %v626
        %v628 = vpop.f32.mrf.mxu0
        %v629 = vpop.f32.mrf.mxu0
        %v630 = vadd.f32 0.0, %v629
        %v631 = vpop.f32.mrf.mxu0
        %632 = vmatprep.mubr.bf16.mxu0 %v476
        %633 = vmatmul.mubr.bf16.gmra.mxu0 %v355
        %v634 = vpop.f32.mrf.mxu0
        %v635 = vadd.f32 0.0, %v634
        %v636 = vpop.f32.mrf.mxu0
        %v637 = vpop.f32.mrf.mxu0
        %v638 = vadd.f32 0.0, %v637
        %v639 = vpop.f32.mrf.mxu0
        %640 = vmatprep.mubr.bf16.mxu0 %v479
        %641 = vmatmul.mubr.bf16.gmra.mxu0 %v357
        %v642 = vpop.f32.mrf.mxu0
        %v643 = vadd.f32 0.0, %v642
        %v644 = vpop.f32.mrf.mxu0
        %v645 = vpop.f32.mrf.mxu0
        %v646 = vadd.f32 0.0, %v645
        %v647 = vpop.f32.mrf.mxu0
        %648 = vdwg.mxu0
        %649 = vst [vmem:[%s166] sm:$0xff] %v523
        %650 = vst [vmem:[%s166 + $0x8] sm:$0xff] %v526
        %651 = vst [vmem:[%s166 + $0x10] sm:$0xff] %v531
        %652 = vst [vmem:[%s166 + $0x18] sm:$0xff] %v534
        %653 = vst [vmem:[%s166 + $0x20] sm:$0xff] %v539
        %654 = vst [vmem:[%s166 + $0x28] sm:$0xff] %v542
        %655 = vst [vmem:[%s166 + $0x30] sm:$0xff] %v547
        %656 = vst [vmem:[%s166 + $0x38] sm:$0xff] %v550
        %657 = vst [vmem:[%s166 + $0x40] sm:$0xff] %v555
        %658 = vst [vmem:[%s166 + $0x48] sm:$0xff] %v558
        %659 = vst [vmem:[%s166 + $0x50] sm:$0xff] %v563
        %660 = vst [vmem:[%s166 + $0x58] sm:$0xff] %v566
        %661 = vst [vmem:[%s166 + $0x60] sm:$0xff] %v571
        %662 = vst [vmem:[%s166 + $0x68] sm:$0xff] %v574
        %663 = vst [vmem:[%s166 + $0x70] sm:$0xff] %v579
        %664 = vst [vmem:[%s166 + $0x78] sm:$0xff] %v582
        %665 = vst [vmem:[%s166 + $0x80] sm:$0xff] %v587
        %666 = vst [vmem:[%s166 + $0x88] sm:$0xff] %v590
        %667 = vst [vmem:[%s166 + $0x90] sm:$0xff] %v595
        %668 = vst [vmem:[%s166 + $0x98] sm:$0xff] %v598
        %669 = vst [vmem:[%s166 + $0xa0] sm:$0xff] %v603
        %670 = vst [vmem:[%s166 + $0xa8] sm:$0xff] %v606
        %671 = vst [vmem:[%s166 + $0xb0] sm:$0xff] %v611
        %672 = vst [vmem:[%s166 + $0xb8] sm:$0xff] %v614
        %673 = vst [vmem:[%s166 + $0xc0] sm:$0xff] %v619
        %674 = vst [vmem:[%s166 + $0xc8] sm:$0xff] %v622
        %675 = vst [vmem:[%s166 + $0xd0] sm:$0xff] %v627
        %676 = vst [vmem:[%s166 + $0xd8] sm:$0xff] %v630
        %677 = vst [vmem:[%s166 + $0xe0] sm:$0xff] %v635
        %678 = vst [vmem:[%s166 + $0xe8] sm:$0xff] %v638
        %679 = vst [vmem:[%s166 + $0xf0] sm:$0xff] %v643
        %680 = vst [vmem:[%s166 + $0xf8] sm:$0xff] %v646
        %s681 = sand.u32 %s90, 1
        %s682 = scalar_lea.sflag [#allocation3], %s681
        %s683 = sand.u32 %s90, 1
        %s684 = smul.addr %s683, 256
        %s685 = scalar_lea.vmem [#allocation2], %s684
        // Predicated region
        $region29: #{tpu_custom_call.1} parent=27 // pred_check
          %p686 = pneg %p100
        $region30: #{tpu_custom_call.1} parent=27 // pred_check_branch
          %688 = sbr.rel (%p686) target = $region32
        $region31: #{tpu_custom_call.1} parent=27 // pred_region
          %s689 = smul.u32 32, %s20
          %s691 = ssub.s32 4096, 4096
          %692 = vsyncadd %s682, %s691
          %s693 = sadd.s32 %s21, %s689
          %s694 = smul.addr %s693, 128
          %s695 = scalar_lea.hbm %s2, %s694
          %s696 = sshll.u32 %s685, 4
          %s697 = int_to_ptr.vmem [resolvable:$true] %s696
          %702 = dma.vmem_to_hbm [thread:$0]  %s697, 4096, %s695, %s682, 128, 128, 8
        $region32: #{tpu_custom_call.1} parent=27 // pred_fallthru
          _
      $region28: #{tpu_custom_call.1} parent=5 // pred_fallthru
        _
      %p703 = scmp.le.s32.totalorder 2, %s11
      // Predicated region
      $region33: #{tpu_custom_call.1} parent=5 // pred_check
        %p704 = pneg %p703
      $region34: #{tpu_custom_call.1} parent=5 // pred_check_branch
        %706 = sbr.rel (%p704) target = $region36
      $region35: #{tpu_custom_call.1} parent=5 // pred_region
        %s707 = ssub.s32 %s11, 2
        // Predicated region
        $region37: #{tpu_custom_call.1} parent=35 // pred_check
          %p708 = pneg %p106
        $region38: #{tpu_custom_call.1} parent=35 // pred_check_branch
          %710 = sbr.rel (%p708) target = $region40
        $region39: #{tpu_custom_call.1} parent=35 // pred_region
          %s711 = sand.u32 %s91, 1
          %s712 = scalar_lea.sflag [#allocation3], %s711
          %s713 = sand.u32 %s91, 1
          %s714 = smul.addr %s713, 256
          %s715 = scalar_lea.vmem [#allocation2], %s714
          %716 = dma.done %s712, 4096
        $region40: #{tpu_custom_call.1} parent=35 // pred_fallthru
          _
      $region36: #{tpu_custom_call.1} parent=5 // pred_fallthru
        _
    $region6: #{tpu_custom_call.1} parent=1 // loop_footer
      %s15 = sadd.s32 1, %s11
    $region7: #{tpu_custom_call.1} parent=1 // loop_footer_branch
      %10 = sbr.rel target = $region3
    $region8: #{tpu_custom_call.1} parent=1 // loop_exit
      _
    %717 = vsyncpa [#allocation3], 1
    %s718 = scalar_lea.sflag [#allocation3], 1
    %719 = vsyncpa %s718, 1

</llo_original>
